<compile_context>
chip_gen: v5e
topology: v5e:2x2
jax: 0.10.0
libtpu: 0.0.40
codegen_flags: <defaults>
</compile_context>

<pallas_src>
import functools

import jax
import jax.numpy as jnp
from jax.experimental import pallas as pl
from jax.experimental.pallas import tpu as pltpu

LANE = 128  # TPU vreg lane width


def linear_kernel(x_ref, w_ref, b_ref, o_ref):
    # x_ref: (Bblk, IN), w_ref: (IN, OUT_P), b_ref: (1, OUT_P), o_ref: (Bblk, OUT_P)
    acc = jnp.dot(x_ref[...], w_ref[...], preferred_element_type=jnp.float32)  # MXU
    o_ref[...] = (acc + b_ref[...]).astype(o_ref.dtype)  # bias add under MXU result


def prep_linear_params(weight, bias):
    """One-time parameter prep.

    weight: (OUT, IN) f32 in PyTorch nn.Linear layout.
    bias:   (OUT,)    f32.
    Returns (IN, OUT_pad) weight and (1, OUT_pad) bias, zero-padded so the
    kernel's output lane dimension is a full multiple of 128 (dense stores).
    """
    out_features, in_features = weight.shape
    out_pad = max(LANE, pl.cdiv(out_features, LANE) * LANE)
    w_p = jnp.zeros((in_features, out_pad), weight.dtype)
    w_p = w_p.at[:, :out_features].set(weight.T)
    b_p = jnp.zeros((1, out_pad), bias.dtype)
    b_p = b_p.at[0, :out_features].set(bias)
    return w_p, b_p


def _cost_estimate(batch, in_features, out_features):
    # Logical dims only (advisory hint for XLA's scheduler).
    return pl.CostEstimate(
        flops=2 * batch * in_features * out_features,
        transcendentals=0,
        bytes_accessed=4 * (batch * in_features
                            + in_features * out_features
                            + out_features
                            + batch * out_features),
    )


def linear_pallas_padded(x, w_p, b_p, out_features, *, batch_block=512):
    """Returns the lane-padded (B, OUT_pad) result (dense stores, no slice).

    Downstream Pallas kernels should consume this padded slab directly; slice
    to (B, out_features) only once at the final model boundary.
    """
    B, in_features = x.shape
    out_pad = w_p.shape[1]
    cost = _cost_estimate(B, in_features, out_features)

    if B >= 2 * batch_block and B % batch_block == 0:
        # Large-batch path: 1-D parallel grid over B (multiple-of-8 row blocks),
        # weight/bias stay fully resident (index_map -> (0, 0)).  The parallel
        # semantics let v7x shard the batch axis across its 2 TensorCores.
        return pl.pallas_call(
            linear_kernel,
            out_shape=jax.ShapeDtypeStruct((B, out_pad), x.dtype),
            grid=(B // batch_block,),
            in_specs=[
                pl.BlockSpec((batch_block, in_features), lambda i: (i, 0)),
                pl.BlockSpec((in_features, out_pad), lambda i: (0, 0)),
                pl.BlockSpec((1, out_pad), lambda i: (0, 0)),
            ],
            out_specs=pl.BlockSpec((batch_block, out_pad), lambda i: (i, 0)),
            compiler_params=pltpu.CompilerParams(
                dimension_semantics=("parallel",)),
            cost_estimate=cost,
        )(x, w_p, b_p)

    # Small-batch path: no grid, single invocation, whole arrays in VMEM
    # (~10 KiB total residency -- far under the scoped VMEM limit on all gens).
    return pl.pallas_call(
        linear_kernel,
        out_shape=jax.ShapeDtypeStruct((B, out_pad), x.dtype),
        in_specs=[
            pl.BlockSpec(memory_space=pltpu.MemorySpace.VMEM),
            pl.BlockSpec(memory_space=pltpu.MemorySpace.VMEM),
            pl.BlockSpec(memory_space=pltpu.MemorySpace.VMEM),
        ],
        out_specs=pl.BlockSpec(memory_space=pltpu.MemorySpace.VMEM),
        cost_estimate=cost,
    )(x, w_p, b_p)


@functools.partial(jax.jit, static_argnames=("out_features",))
def model_forward(x, w_p, b_p, out_features):
    """Full Model.forward: one jit'd program (kernel + single boundary slice)."""
    y_pad = linear_pallas_padded(x, w_p, b_p, out_features)
    # The ONLY slice, at the model boundary.  If this linear fed another
    # Pallas kernel, that kernel would read y_pad directly and this slice
    # would disappear entirely.
    return y_pad[:, :out_features]


if __name__ == "__main__":
    key = jax.random.PRNGKey(0)
    kx, kw, kb = jax.random.split(key, 3)

    B, IN, OUT = 8, 10, 10
    x = jax.random.normal(kx, (B, IN), dtype=jnp.float32)
    # Deterministic parameter init mimicking nn.Linear (uniform in +-1/sqrt(IN))
    bound = 1.0 / jnp.sqrt(jnp.float32(IN))
    weight = jax.random.uniform(kw, (OUT, IN), jnp.float32, -bound, bound)
    bias = jax.random.uniform(kb, (OUT,), jnp.float32, -bound, bound)

    # One-time prep (transpose + lane padding) -- not a per-call cost.
    w_p, b_p = prep_linear_params(weight, bias)

    y = model_forward(x, w_p, b_p, OUT)
    jax.block_until_ready(y)

    # sanity check against plain JAX reference
    y_ref = x @ weight.T + bias
    assert y.shape == (B, OUT)
    assert jnp.allclose(y, y_ref, atol=1e-5, rtol=1e-5), "mismatch vs reference"
    print("KERNEL_OK")
</pallas_src>

<mosaic_0001>
module attributes {stable_mosaic.version = 11 : i64} {
  func.func @linear_kernel(%arg0: memref<8x10xf32, #tpu.memory_space<vmem>>, %arg1: memref<10x128xf32, #tpu.memory_space<vmem>>, %arg2: memref<1x128xf32, #tpu.memory_space<vmem>>, %arg3: memref<8x128xf32, #tpu.memory_space<vmem>>) attributes {dimension_semantics = [], scalar_prefetch = 0 : i64, scratch_operands = 0 : i64, tpu.core_type = #tpu.core_type<tc>} {
    %c0 = arith.constant 0 : index
    %c0_0 = arith.constant 0 : index
    %0 = vector.load %arg0[%c0, %c0_0] : memref<8x10xf32, #tpu.memory_space<vmem>>, vector<8x10xf32>
    %c0_1 = arith.constant 0 : index
    %c0_2 = arith.constant 0 : index
    %1 = vector.load %arg1[%c0_1, %c0_2] : memref<10x128xf32, #tpu.memory_space<vmem>>, vector<10x128xf32>
    %cst = arith.constant dense<0.000000e+00> : vector<8x128xf32>
    %2 = tpu.matmul %0, %1, %cst {dimension_numbers = #tpu.dot_dimension_numbers<[1], [0], [0], [1], [0, 0, 1, 1], [], []>} : vector<8x10xf32>, vector<10x128xf32>, vector<8x128xf32> -> vector<8x128xf32>
    %c0_3 = arith.constant 0 : index
    %c0_4 = arith.constant 0 : index
    %3 = vector.load %arg2[%c0_3, %c0_4] : memref<1x128xf32, #tpu.memory_space<vmem>>, vector<1x128xf32>
    %4 = vector.broadcast %3 : vector<1x128xf32> to vector<8x128xf32>
    %5 = arith.addf %2, %4 : vector<8x128xf32>
    %c0_5 = arith.constant 0 : index
    %c0_6 = arith.constant 0 : index
    %6 = vector.load %arg3[%c0_5, %c0_6] : memref<8x128xf32, #tpu.memory_space<vmem>>, vector<8x128xf32>
    tpu.vector_store %arg3[%c0_5, %c0_6], %5 {strides = array<i32>} : memref<8x128xf32, #tpu.memory_space<vmem>>, vector<8x128xf32>,
    return
  }
}

</mosaic_0001>

<llo_original>
// kernel: model_forward.1
$region0: #{model_forward.1}
  #allocation0 [shape = 'u32[]', space=smem, size = 0x4, offset = 0x4, fixed_abs, tag = 'smem constant byte address 0x4 - core index']
  #allocation1 [shape = 'u32[72,128]{1,0:T(1,128)}', space=vmem, size = 0x9000, scoped, tag = 'internal scratch']
  %s0 = inlined_call_operand.hbm [shape: f32[8,10], index: 0, kind: input, shape index: {}]
  %s1 = inlined_call_operand.hbm [shape: f32[10,128], index: 1, kind: input, shape index: {}]
  %s2 = inlined_call_operand.vmem [shape: f32[1,128], index: 2, kind: input, shape index: {}]
  %s3 = inlined_call_operand.hbm [shape: f32[8,128], index: 3, kind: output, shape index: {}]
  %s4 = sld [smem:[#allocation0]]
  $region30: #{model_forward.1} parent=0
    _
  %s6 = ssub.s32 1, %s4
  %s7 = scalar_select 0, %s6, %s4
  $region1: #{model_forward.1} parent=0
    #allocation2 [shape = 'u8[4096]{0}', space=vmem, size = 0x1000, scoped, tag = 'input window, operand 0, single buffered']
    #allocation3 [shape = 's32[1]{0}', space=sflag, size = 0x4, scoped, tag = 'scoped memory for model_forward.1']
    #allocation4 [shape = 's32[1]{0}', space=sflag, size = 0x4, scoped, tag = 'scoped memory for model_forward.1']
    #allocation5 [shape = 'u8[8192]{0}', space=vmem, size = 0x2000, scoped, tag = 'input window, operand 1, single buffered']
    #allocation6 [shape = 's32[1]{0}', space=sflag, size = 0x4, scoped, tag = 'scoped memory for model_forward.1']
    #allocation7 [shape = 'u8[4096]{0}', space=vmem, size = 0x1000, scoped, tag = 'output window, operand 0, single buffered']
    %8 = vsyncpa [#allocation3], 0
    %9 = vsyncpa [#allocation6], 0
    %10 = vsyncpa [#allocation4], 0
    // Predicated region
    $region2: #{model_forward.1} parent=1 // pred_check
      _
    $region3: #{model_forward.1} parent=1 // pred_check_branch
      %12 = sbr.rel (0) target = $region5
    $region4: #{model_forward.1} parent=1 // pred_region
      %14 = vsyncadd [#allocation3], 0
      %s16 = sshll.u32 %s0, 4
      %s17 = int_to_ptr.hbm [resolvable:$true] %s16
      %s18 = sshll.u32 [#allocation2], 4
      %s19 = int_to_ptr.vmem [resolvable:$true] %s18
      %21 = dma.hbm_to_vmem [thread:$0]  %s17, 128, %s19, [#allocation3]
    $region5: #{model_forward.1} parent=1 // pred_fallthru
      _
    // Predicated region
    $region6: #{model_forward.1} parent=1 // pred_check
      _
    $region7: #{model_forward.1} parent=1 // pred_check_branch
      %23 = sbr.rel (0) target = $region9
    $region8: #{model_forward.1} parent=1 // pred_region
      %25 = vsyncadd [#allocation6], 0
      %s26 = sshll.u32 %s1, 4
      %s27 = int_to_ptr.hbm [resolvable:$true] %s26
      %s28 = sshll.u32 [#allocation5], 4
      %s29 = int_to_ptr.vmem [resolvable:$true] %s28
      %34 = dma.hbm_to_vmem [thread:$0]  %s27, 256, %s29, [#allocation6], 128, 128, 8
    $region9: #{model_forward.1} parent=1 // pred_fallthru
      _
    // Predicated region
    $region10: #{model_forward.1} parent=1 // pred_check
      _
    $region11: #{model_forward.1} parent=1 // pred_check_branch
      %36 = sbr.rel (0) target = $region13
    $region12: #{model_forward.1} parent=1 // pred_region
      _
    $region13: #{model_forward.1} parent=1 // pred_fallthru
      _
    // Predicated region
    $region14: #{model_forward.1} parent=1 // pred_check
      _
    $region15: #{model_forward.1} parent=1 // pred_check_branch
      %38 = sbr.rel (0) target = $region17
    $region16: #{model_forward.1} parent=1 // pred_region
      %40 = dma.done [#allocation3], 128
    $region17: #{model_forward.1} parent=1 // pred_fallthru
      _
    // Predicated region
    $region18: #{model_forward.1} parent=1 // pred_check
      _
    $region19: #{model_forward.1} parent=1 // pred_check_branch
      %42 = sbr.rel (0) target = $region21
    $region20: #{model_forward.1} parent=1 // pred_region
      %44 = dma.done [#allocation6], 256
    $region21: #{model_forward.1} parent=1 // pred_fallthru
      _
    %v45 = vld [vmem:[#allocation2] sm:$0xff]
    %v46 = vld [vmem:[#allocation5] sm:$0xff]
    %v47 = vld [vmem:[#allocation5 + $0x8] sm:$0x3]
    %v48 = vld [vmem:[%s2] sm:$0x1]
    %v50 = vperm.slane %v48, 0
    %vm52 = vcmask 80896
    %v54 = vsel %vm52, %v45, 0
    %vm56 = vcmask 1041408
    %v58 = vsel %vm56, %v47, 0
    %60 = vmatpush.msra.mxu0 0.0
    %61 = vmatpush.msra.mxu0 0.0
    %62 = vmatpush.msra.mxu0 0.0
    %63 = vmatpush.msra.mxu0 0.0
    %64 = vmatpush.msra.mxu0 0.0
    %65 = vmatpush.msra.mxu0 0.0
    %66 = vmatpush.msra.mxu0 0.0
    %67 = vmatpush.msra.mxu0 0.0
    %68 = vmatpush.msra.mxu0 0.0
    %69 = vmatpush.msra.mxu0 0.0
    %70 = vmatpush.msra.mxu0 0.0
    %71 = vmatpush.msra.mxu0 0.0
    %72 = vmatpush.msra.mxu0 0.0
    %73 = vmatpush.msra.mxu0 0.0
    %74 = vmatpush.msra.mxu0 %v58
    %75 = vmatpush.msra.mxu0 %v46
    %76 = vmatmul.f32.gmra.mxu0 %v54
    %v77 = vpop.f32.mrf.mxu0
    %v78 = vadd.f32 %v50, %v77
    %79 = vdwg.mxu0
    %80 = vst [vmem:[#allocation7] sm:$0xff] %v78
    // Predicated region
    $region22: #{model_forward.1} parent=1 // pred_check
      _
    $region23: #{model_forward.1} parent=1 // pred_check_branch
      %82 = sbr.rel (0) target = $region25
    $region24: #{model_forward.1} parent=1 // pred_region
      %84 = vsyncadd [#allocation4], 0
      %s86 = sshll.u32 [#allocation7], 4
      %s87 = int_to_ptr.vmem [resolvable:$true] %s86
      %s88 = sshll.u32 %s3, 4
      %s89 = int_to_ptr.hbm [resolvable:$true] %s88
      %91 = dma.vmem_to_hbm [thread:$0]  %s87, 128, %s89, [#allocation4]
    $region25: #{model_forward.1} parent=1 // pred_fallthru
      _
    // Predicated region
    $region26: #{model_forward.1} parent=1 // pred_check
      _
    $region27: #{model_forward.1} parent=1 // pred_check_branch
      %93 = sbr.rel (0) target = $region29
    $region28: #{model_forward.1} parent=1 // pred_region
      %95 = dma.done [#allocation4], 128
    $region29: #{model_forward.1} parent=1 // pred_fallthru
      _
    %96 = vsyncpa [#allocation3], 1
    %97 = vsyncpa [#allocation6], 1
    %98 = vsyncpa [#allocation4], 1

</llo_original>
